<compile_context>
chip_gen: v7x
topology: tpu7x:2x2x1
jax: 0.10.0
libtpu: 0.0.40
codegen_flags: <defaults>
</compile_context>

<pallas_src>
from functools import partial
from typing import List, Union

import numpy as np

import jax
import jax.numpy as jnp
from jax import lax
from jax.experimental import pallas as pl
from jax.experimental.pallas import tpu as pltpu

_GT_PAD_START = 1.0e9   # padded GT rows -> inter = 0 -> IoU = 0
_GT_PAD_END = -1.0e9


def _iou_kernel(prop_ref, gt_ref, iou_ref):
    """IoU matrix for a block of Bb videos.

    prop_ref: (Bb, 2, N)  row 0 = proposal starts, row 1 = proposal ends (lanes)
    gt_ref:   (Bb, M, 2)  [:, :, 0] = GT starts, [:, :, 1] = GT ends (sublanes)
    iou_ref:  (Bb, M, N)  1-D temporal IoU (0 for padded GT rows / proposals)
    """
    ps = prop_ref[:, 0:1, :]          # (Bb, 1, N)
    pe = prop_ref[:, 1:2, :]          # (Bb, 1, N)
    gs = gt_ref[:, :, 0:1]            # (Bb, M, 1)
    ge = gt_ref[:, :, 1:2]            # (Bb, M, 1)

    # Broadcast to (Bb, M, N) on the VPU.
    inter = jnp.maximum(jnp.minimum(pe, ge) - jnp.maximum(ps, gs), 0.0)
    union = (pe - ps) + (ge - gs) - inter
    # Padded GT rows make union hugely negative -> clamp -> inter(=0) * recip = 0.
    iou_ref[...] = inter * pl.reciprocal(jnp.maximum(union, 1e-8), approx=True)


def compute_iou_matrix(prop, gt, *, block_b):
    """prop: (B, 2, N) f32; gt: (B, M, 2) f32 -> (B, M, N) IoU matrix."""
    B, _, N = prop.shape
    M = gt.shape[1]
    grid = (B // block_b,)
    return pl.pallas_call(
        _iou_kernel,
        out_shape=jax.ShapeDtypeStruct((B, M, N), jnp.float32),
        grid=grid,
        in_specs=[
            pl.BlockSpec((block_b, 2, N), lambda b: (b, 0, 0)),
            pl.BlockSpec((block_b, M, 2), lambda b: (b, 0, 0)),
        ],
        out_specs=pl.BlockSpec((block_b, M, N), lambda b: (b, 0, 0)),
        compiler_params=pltpu.CompilerParams(dimension_semantics=("parallel",)),
    )(prop, gt)


def _ap_from_iou(iou, scores, p_valid, g_valid, n_labels, thresholds):
    """All-point-interpolated AP for every threshold.

    iou: (B, M, N); scores/p_valid: (B, N); g_valid: (B, M); thresholds: (T,).
    """
    B, M, N = iou.shape
    flat_scores = jnp.where(p_valid, scores, -jnp.inf).reshape(-1)
    order = jnp.argsort(-flat_scores)             # threshold-independent, computed once
    k = jnp.arange(1, B * N + 1, dtype=jnp.float32)
    denom = jnp.maximum(n_labels, 1.0)
    lane = jnp.arange(N)

    def one_threshold(thr):
        potential = (iou >= thr) & p_valid[:, None, :] & g_valid[:, :, None]

        # Greedy one-to-one matching: each GT claims the first still-unmatched
        # proposal (in the given proposal order) with IoU >= threshold.
        def step(matched, pot_m):                 # matched, pot_m: (B, N) bool
            avail = pot_m & jnp.logical_not(matched)
            has = jnp.any(avail, axis=-1)         # (B,)
            j = jnp.argmax(avail, axis=-1)        # first available proposal
            sel = (lane[None, :] == j[:, None]) & has[:, None]
            return matched | sel, None

        matched, _ = lax.scan(step, jnp.zeros((B, N), jnp.bool_),
                              jnp.moveaxis(potential, 1, 0))

        tp = matched.reshape(-1).astype(jnp.float32)[order]
        cum_tp = jnp.cumsum(tp)
        precision = cum_tp / k
        recall = cum_tp / denom
        # Interpolated precision envelope: p_env(r) = max_{r' >= r} p(r').
        prec_env = lax.associative_scan(jnp.maximum, precision[::-1])[::-1]
        recall_prev = jnp.concatenate([jnp.zeros((1,), jnp.float32), recall[:-1]])
        return jnp.sum((recall - recall_prev) * prec_env)

    return jax.vmap(one_threshold)(thresholds)


@partial(jax.jit, static_argnames=("block_b",))
def _ap_pipeline(prop, gt, scores, p_valid, g_valid, n_labels, thresholds, *, block_b):
    iou = compute_iou_matrix(prop, gt, block_b=block_b)
    return _ap_from_iou(iou, scores, p_valid, g_valid, n_labels, thresholds)


class AP:
    """Average Precision (mean precision of the PR curve) at temporal-IoU thresholds."""

    def __init__(self, iou_thresholds: Union[float, List[float]] = 0.5, tqdm_pos: int = 1):
        self.iou_thresholds: List[float] = (
            iou_thresholds if isinstance(iou_thresholds, list) else [iou_thresholds]
        )
        self.ap: dict = {}

    def __call__(self, fake_periods_list, proposals_list) -> dict:
        return self.forward(fake_periods_list, proposals_list)

    def forward(self, fake_periods_list, proposals_list) -> dict:
        B = len(proposals_list)
        props_np = [np.asarray(p, np.float32).reshape(-1, 3) for p in proposals_list]
        gts_np = [np.asarray(g, np.float32).reshape(-1, 2) for g in fake_periods_list]

        n_max = max([p.shape[0] for p in props_np] + [1])
        m_max = max([g.shape[0] for g in gts_np] + [1])
        N = max(-(-n_max // 128) * 128, 128)      # lane-dense proposal axis
        M = max(-(-m_max // 8) * 8, 8)            # sublane-aligned GT axis
        # Batch up to 8 videos per grid step (amortize per-step overhead) while
        # keeping >= 2 grid steps so v7x's 2 TensorCores both get work.
        Bb = max(1, min(8, -(-B // 2)))
        B_pad = -(-B // Bb) * Bb

        # Build padded batch arrays in NumPy; single device transfer per array.
        prop = np.zeros((B_pad, 2, N), np.float32)
        scores = np.zeros((B_pad, N), np.float32)
        p_valid = np.zeros((B_pad, N), np.bool_)
        gt = np.empty((B_pad, M, 2), np.float32)
        gt[:, :, 0] = _GT_PAD_START
        gt[:, :, 1] = _GT_PAD_END
        g_valid = np.zeros((B_pad, M), np.bool_)

        n_labels = 0
        for b, (p, g) in enumerate(zip(props_np, gts_np)):
            n = p.shape[0]
            if n:
                scores[b, :n] = p[:, 0]
                prop[b, 0, :n] = p[:, 1]
                prop[b, 1, :n] = p[:, 2]
                p_valid[b, :n] = True
            m = g.shape[0]
            if m:
                gt[b, :m, :] = g
                g_valid[b, :m] = True
            n_labels += m

        aps = _ap_pipeline(
            jnp.asarray(prop), jnp.asarray(gt), jnp.asarray(scores),
            jnp.asarray(p_valid), jnp.asarray(g_valid),
            jnp.float32(n_labels), jnp.asarray(self.iou_thresholds, jnp.float32),
            block_b=Bb,
        )
        aps = np.asarray(jax.block_until_ready(aps))   # single host transfer
        for thr, v in zip(self.iou_thresholds, aps):
            self.ap[f"AP@{thr}"] = float(v)
        return self.ap


if __name__ == "__main__":
    key = jax.random.PRNGKey(0)
    B, N_PROP, N_GT = 2, 100, 5

    proposals_list, fake_periods_list = [], []
    for _ in range(B):
        key, k1, k2, k3, k4, k5 = jax.random.split(key, 6)
        p_begin = jax.random.uniform(k1, (N_PROP,), minval=0.0, maxval=10.0)
        p_dur = jax.random.uniform(k2, (N_PROP,), minval=0.1, maxval=2.0)
        score = jax.random.uniform(k3, (N_PROP,))
        # proposals: rows of (score, start, end)
        proposals_list.append(jnp.stack([score, p_begin, p_begin + p_dur], axis=1))
        g_begin = jax.random.uniform(k4, (N_GT,), minval=0.0, maxval=10.0)
        g_dur = jax.random.uniform(k5, (N_GT,), minval=0.2, maxval=2.0)
        # fake periods: rows of (start, end)
        fake_periods_list.append(jnp.stack([g_begin, g_begin + g_dur], axis=1))

    metric = AP(iou_thresholds=[0.5, 0.75, 0.95])
    result = metric(fake_periods_list, proposals_list)
    for k_name, v in result.items():
        assert 0.0 <= v <= 1.0 + 1e-6, (k_name, v)
    print("KERNEL_OK")
</pallas_src>

<mosaic_0001>
module attributes {stable_mosaic.version = 11 : i64} {
  func.func @_iou_kernel(%arg0: i32, %arg1: memref<1x2x128xf32, #tpu.memory_space<vmem>>, %arg2: memref<1x8x2xf32, #tpu.memory_space<vmem>>, %arg3: memref<1x8x128xf32, #tpu.memory_space<vmem>>) attributes {dimension_semantics = [#tpu.dimension_semantics<parallel>], iteration_bounds = array<i64: 2>, scalar_prefetch = 0 : i64, scratch_operands = 0 : i64, tpu.core_type = #tpu.core_type<tc>, window_params = [{transform_indices = @transform_0, window_bounds = array<i64: 1, 2, 128>}, {transform_indices = @transform_1, window_bounds = array<i64: 1, 8, 2>}, {transform_indices = @transform_2, window_bounds = array<i64: 1, 8, 128>}]} {
    %c0 = arith.constant 0 : index
    %c0_0 = arith.constant 0 : index
    %c0_1 = arith.constant 0 : index
    %0 = vector.load %arg1[%c0, %c0_0, %c0_1] : memref<1x2x128xf32, #tpu.memory_space<vmem>>, vector<1x1x128xf32>
    %c0_2 = arith.constant 0 : index
    %c1 = arith.constant 1 : index
    %c0_3 = arith.constant 0 : index
    %1 = vector.load %arg1[%c0_2, %c1, %c0_3] : memref<1x2x128xf32, #tpu.memory_space<vmem>>, vector<1x1x128xf32>
    %c0_4 = arith.constant 0 : index
    %c0_5 = arith.constant 0 : index
    %c0_6 = arith.constant 0 : index
    %2 = vector.load %arg2[%c0_4, %c0_5, %c0_6] : memref<1x8x2xf32, #tpu.memory_space<vmem>>, vector<1x8x1xf32>
    %c0_7 = arith.constant 0 : index
    %c0_8 = arith.constant 0 : index
    %c1_9 = arith.constant 1 : index
    %3 = vector.load %arg2[%c0_7, %c0_8, %c1_9] : memref<1x8x2xf32, #tpu.memory_space<vmem>>, vector<1x8x1xf32>
    %4 = vector.broadcast %1 : vector<1x1x128xf32> to vector<1x8x128xf32>
    %5 = vector.broadcast %3 : vector<1x8x1xf32> to vector<1x8x128xf32>
    %6 = arith.minimumf %4, %5 : vector<1x8x128xf32>
    %7 = vector.broadcast %0 : vector<1x1x128xf32> to vector<1x8x128xf32>
    %8 = vector.broadcast %2 : vector<1x8x1xf32> to vector<1x8x128xf32>
    %9 = arith.maximumf %7, %8 : vector<1x8x128xf32>
    %10 = arith.subf %6, %9 : vector<1x8x128xf32>
    %cst = arith.constant 0.000000e+00 : f32
    %11 = vector.broadcast %cst : f32 to vector<1x8x128xf32>
    %12 = arith.maximumf %10, %11 : vector<1x8x128xf32>
    %13 = arith.subf %1, %0 : vector<1x1x128xf32>
    %14 = arith.subf %3, %2 : vector<1x8x1xf32>
    %15 = vector.broadcast %13 : vector<1x1x128xf32> to vector<1x8x128xf32>
    %16 = vector.broadcast %14 : vector<1x8x1xf32> to vector<1x8x128xf32>
    %17 = arith.addf %15, %16 : vector<1x8x128xf32>
    %18 = arith.subf %17, %12 : vector<1x8x128xf32>
    %cst_10 = arith.constant 9.99999993E-9 : f32
    %19 = vector.broadcast %cst_10 : f32 to vector<1x8x128xf32>
    %20 = arith.maximumf %18, %19 : vector<1x8x128xf32>
    %21 = tpu.reciprocal %20 {approx = true} : vector<1x8x128xf32> -> vector<1x8x128xf32>
    %22 = arith.mulf %12, %21 : vector<1x8x128xf32>
    %c0_11 = arith.constant 0 : index
    %c0_12 = arith.constant 0 : index
    %c0_13 = arith.constant 0 : index
    %23 = vector.load %arg3[%c0_11, %c0_12, %c0_13] : memref<1x8x128xf32, #tpu.memory_space<vmem>>, vector<1x8x128xf32>
    tpu.vector_store %arg3[%c0_11, %c0_12, %c0_13], %22 {strides = array<i32>} : memref<1x8x128xf32, #tpu.memory_space<vmem>>, vector<1x8x128xf32>,
    return
  }
  func.func @transform_0(%arg0: i32) -> (i32, i32, i32) {
    %c0_i32 = arith.constant 0 : i32
    %c0_i32_0 = arith.constant 0 : i32
    %c0_i32_1 = arith.constant 0 : i32
    return %arg0, %c0_i32, %c0_i32_0 : i32, i32, i32
  }
  func.func @transform_1(%arg0: i32) -> (i32, i32, i32) {
    %c0_i32 = arith.constant 0 : i32
    %c0_i32_0 = arith.constant 0 : i32
    %c0_i32_1 = arith.constant 0 : i32
    return %arg0, %c0_i32, %c0_i32_0 : i32, i32, i32
  }
  func.func @transform_2(%arg0: i32) -> (i32, i32, i32) {
    %c0_i32 = arith.constant 0 : i32
    %c0_i32_0 = arith.constant 0 : i32
    %c0_i32_1 = arith.constant 0 : i32
    return %arg0, %c0_i32, %c0_i32_0 : i32, i32, i32
  }
}

</mosaic_0001>

<llo_original>
// kernel: custom-call
$region0: #{custom-call}
  %s0 = inlined_call_operand.vmem [shape: pred[3,2,128], index: 0, kind: output, shape index: {}]

// kernel: _ap_pipeline.1
$region0: #{_ap_pipeline.1}
  #allocation0 [shape = 'u32[]', space=smem, size = 0x4, offset = 0x4, fixed_abs, tag = 'smem constant byte address 0x4 - core index']
  #allocation1 [shape = 'u32[144,128]{1,0:T(1,128)}', space=vmem, size = 0x12000, scoped, tag = 'internal scratch']
  %s0 = inlined_call_operand.vmem [shape: f32[2,2,128], index: 0, kind: input, shape index: {}]
  %s1 = inlined_call_operand.vmem [shape: f32[2,8,2], index: 1, kind: input, shape index: {}]
  %s2 = inlined_call_operand.vmem [shape: f32[2,8,128], index: 2, kind: output, shape index: {}]
  %s3 = sld [smem:[#allocation0]]
  $region41: #{_ap_pipeline.1} parent=0
    _
  %s5 = ssub.s32 1, %s3
  %s6 = scalar_select 0, %s5, %s3
  loop: start=0, step=1, limit=4
  $region2: #{_ap_pipeline.1} parent=0 // loop_pre_header
    _
  $region3: #{_ap_pipeline.1} parent=0 // loop_header
    %s8 = sphi 0, %s12
    %p9 = scmp.ge.s32.totalorder %s8, 4
    %s18 = sphi 0, %s20
    %s21 = sphi 0, %s18
    %s22 = sphi 0, %s21
    %s38 = sphi 0, %s22
    %s44 = sphi 0, %s46
    %s47 = sphi 0, %s44
    %s48 = sphi 0, %s47
    %s64 = sphi 0, %s48
    %s70 = sphi 0, %s72
    %s73 = sphi 0, %s70
    %s74 = sphi 0, %s73
    %s90 = sphi 0, %s74
  $region4: #{_ap_pipeline.1} parent=0 // loop_header_branch
    %11 = sbr.rel (%p9) target = $region8
  $region5: #{_ap_pipeline.1} parent=0 // loop_body
    %s13 = ssub.s32 %s8, 1
    %s14 = ssub.s32 %s8, 2
    %s15 = sadd.s32 %s8, 1
    %s16 = ssub.s32 %s8, %s15
    %p17 = scmp.eq.s32.totalorder %s16, 0
    %s19 = sadd.s32 %s18, 1
    %s20 = scalar_select %p17, %s18, %s19
    %p23 = pneg %p17
    %p24 = scmp.eq.s32.totalorder %s8, 1
    %p25 = por %p23, %p24
    %p26 = scmp.ne.s32.totalorder %s18, %s21
    %p27 = scmp.eq.s32.totalorder %s8, 0
    %p28 = por %p26, %p27
    %p29 = scmp.ne.s32.totalorder %s18, %s21
    %p30 = scmp.eq.s32.totalorder %s13, 1
    %p31 = por %p29, %p30
    %p32 = scmp.ne.s32.totalorder %s21, %s22
    %p33 = scmp.eq.s32.totalorder %s13, 0
    %p34 = por %p32, %p33
    %p35 = scmp.ne.s32.totalorder %s21, %s22
    %p36 = scmp.eq.s32.totalorder %s14, 1
    %p37 = por %p35, %p36
    %p39 = scmp.ne.s32.totalorder %s22, %s38
    %p40 = scmp.eq.s32.totalorder %s14, 0
    %p41 = por %p39, %p40
    %s42 = ssub.s32 %s8, %s15
    %p43 = scmp.eq.s32.totalorder %s42, 0
    %s45 = sadd.s32 %s44, 1
    %s46 = scalar_select %p43, %s44, %s45
    %p49 = pneg %p43
    %p50 = scmp.eq.s32.totalorder %s8, 1
    %p51 = por %p49, %p50
    %p52 = scmp.ne.s32.totalorder %s44, %s47
    %p53 = scmp.eq.s32.totalorder %s8, 0
    %p54 = por %p52, %p53
    %p55 = scmp.ne.s32.totalorder %s44, %s47
    %p56 = scmp.eq.s32.totalorder %s13, 1
    %p57 = por %p55, %p56
    %p58 = scmp.ne.s32.totalorder %s47, %s48
    %p59 = scmp.eq.s32.totalorder %s13, 0
    %p60 = por %p58, %p59
    %p61 = scmp.ne.s32.totalorder %s47, %s48
    %p62 = scmp.eq.s32.totalorder %s14, 1
    %p63 = por %p61, %p62
    %p65 = scmp.ne.s32.totalorder %s48, %s64
    %p66 = scmp.eq.s32.totalorder %s14, 0
    %p67 = por %p65, %p66
    %s68 = ssub.s32 %s8, %s15
    %p69 = scmp.eq.s32.totalorder %s68, 0
    %s71 = sadd.s32 %s70, 1
    %s72 = scalar_select %p69, %s70, %s71
    %p75 = pneg %p69
    %p76 = scmp.eq.s32.totalorder %s8, 1
    %p77 = por %p75, %p76
    %p78 = scmp.ne.s32.totalorder %s70, %s73
    %p79 = scmp.eq.s32.totalorder %s8, 0
    %p80 = por %p78, %p79
    %p81 = scmp.ne.s32.totalorder %s70, %s73
    %p82 = scmp.eq.s32.totalorder %s13, 1
    %p83 = por %p81, %p82
    %p84 = scmp.ne.s32.totalorder %s73, %s74
    %p85 = scmp.eq.s32.totalorder %s13, 0
    %p86 = por %p84, %p85
    %p87 = scmp.ne.s32.totalorder %s73, %s74
    %p88 = scmp.eq.s32.totalorder %s14, 1
    %p89 = por %p87, %p88
    %p91 = scmp.ne.s32.totalorder %s74, %s90
    %p92 = scmp.eq.s32.totalorder %s14, 0
    %p93 = por %p91, %p92
    %p94 = scmp.le.s32.totalorder 1, %s8
    %p95 = scmp.lt.s32.totalorder %s8, 3
    %p96 = pnand %p94, %p95
    %p97 = pneg %p96
    // Predicated region
    $region9: #{_ap_pipeline.1} parent=5 // pred_check
      _
    $region10: #{_ap_pipeline.1} parent=5 // pred_check_branch
      %99 = sbr.rel (%p96) target = $region12
    $region11: #{_ap_pipeline.1} parent=5 // pred_region
      %s100 = ssub.s32 %s8, 1
    $region12: #{_ap_pipeline.1} parent=5 // pred_fallthru
      _
    %p101 = scmp.lt.s32.totalorder %s8, 2
    // Predicated region
    $region13: #{_ap_pipeline.1} parent=5 // pred_check
      %p102 = pneg %p101
    $region14: #{_ap_pipeline.1} parent=5 // pred_check_branch
      %104 = sbr.rel (%p102) target = $region16
    $region15: #{_ap_pipeline.1} parent=5 // pred_region
      // Predicated region
      $region17: #{_ap_pipeline.1} parent=15 // pred_check
        %p105 = pneg %p28
      $region18: #{_ap_pipeline.1} parent=15 // pred_check_branch
        %107 = sbr.rel (%p105) target = $region20
      $region19: #{_ap_pipeline.1} parent=15 // pred_region
        %p108 = scmp.lt.s32.totalorder %s8, 1
        %s109 = scalar_select %p108, %s8, 1
        %s110 = smul.addr %s109, 2
        %s111 = scalar_lea.vmem %s0, %s110
      $region20: #{_ap_pipeline.1} parent=15 // pred_fallthru
        _
      // Predicated region
      $region21: #{_ap_pipeline.1} parent=15 // pred_check
        %p112 = pneg %p54
      $region22: #{_ap_pipeline.1} parent=15 // pred_check_branch
        %114 = sbr.rel (%p112) target = $region24
      $region23: #{_ap_pipeline.1} parent=15 // pred_region
        %p115 = scmp.lt.s32.totalorder %s8, 1
        %s116 = scalar_select %p115, %s8, 1
        %s117 = smul.addr %s116, 8
        %s118 = scalar_lea.vmem %s1, %s117
      $region24: #{_ap_pipeline.1} parent=15 // pred_fallthru
        _
    $region16: #{_ap_pipeline.1} parent=5 // pred_fallthru
      _
    %p119 = scmp.le.s32.totalorder 1, %s8
    %p120 = scmp.lt.s32.totalorder %s8, 3
    %p121 = pnand %p119, %p120
    %p122 = pneg %p121
    // Predicated region
    $region25: #{_ap_pipeline.1} parent=5 // pred_check
      _
    $region26: #{_ap_pipeline.1} parent=5 // pred_check_branch
      %124 = sbr.rel (%p121) target = $region28
    $region27: #{_ap_pipeline.1} parent=5 // pred_region
      %s125 = ssub.s32 %s8, 1
      %p126 = scmp.lt.s32.totalorder %s13, 1
      %s127 = scalar_select %p126, %s13, 1
      %s128 = smul.addr %s127, 2
      %s129 = scalar_lea.vmem %s0, %s128
      %p130 = pneg %p34
      %p131 = pneg %p31
      %p132 = scmp.lt.s32.totalorder %s13, 1
      %s133 = scalar_select %p132, %s13, 1
      %s134 = smul.addr %s133, 8
      %s135 = scalar_lea.vmem %s1, %s134
      %p136 = pneg %p60
      %p137 = pneg %p57
      %p138 = pneg %p86
      %p139 = pneg %p83
      %p140 = scmp.lt.s32.totalorder %s13, 1
      %s141 = scalar_select %p140, %s13, 1
      %s142 = smul.addr %s141, 8
      %s143 = scalar_lea.vmem %s2, %s142
      %p144 = scmp.lt.s32.totalorder %s13, 1
      %s145 = scalar_select %p144, %s13, 1
      %s146 = smul.addr %s145, 2
      %s147 = scalar_lea.vmem %s0, %s146
      %p148 = scmp.lt.s32.totalorder %s13, 1
      %s149 = scalar_select %p148, %s13, 1
      %s150 = smul.addr %s149, 8
      %s151 = scalar_lea.vmem %s1, %s150
      %p152 = scmp.lt.s32.totalorder %s13, 1
      %s153 = scalar_select %p152, %s13, 1
      %s154 = smul.addr %s153, 8
      %s155 = scalar_lea.vmem %s2, %s154
      %v156 = vld [vmem:[%s147] sm:$0x1]
      %v157 = vld [vmem:[%s147 + $0x1] sm:$0x1]
      %v158 = vld [vmem:[%s151] sm:$0xff]
      %v159 = vlaneseq
      %v160 = vshrl.u32 %v159, 7
      %v161 = vsub.s32 0, %v160
      %v162 = vrot.slane %v157, %v161
      %164 = vset.pattern.permute.xlu0 1
      %165 = vperm.xlu0 %164, %v158
      %v166 = vpop.permute.xlu0 %165
      %v168 = vmin.f32 %v162, %v166
      %v169 = vlaneseq
      %v170 = vshrl.u32 %v169, 7
      %v171 = vsub.s32 0, %v170
      %v172 = vrot.slane %v156, %v171
      %173 = vset.pattern.permute.xlu0 0
      %174 = vperm.xlu0 %173, %v158
      %v175 = vpop.permute.xlu0 %174
      %v177 = vmax.f32 %v172, %v175
      %v178 = vsub.f32 %v168, %v177
      %v179 = vmax.f32 %v178, 0.0
      %v180 = vsub.f32 %v157, %v156
      %181 = vrot.lane.b32.xlu0 %v158, 1
      %v182 = vpop.permute.xlu0 %181
      %v184 = vsub.f32 %v158, %v182
      %v185 = vlaneseq
      %v186 = vshrl.u32 %v185, 7
      %v187 = vsub.s32 0, %v186
      %v188 = vrot.slane %v180, %v187
      %190 = vset.pattern.permute.xlu0 1
      %191 = vperm.xlu0 %190, %v184
      %v192 = vpop.permute.xlu0 %191
      %v194 = vadd.f32 %v188, %v192
      %v195 = vsub.f32 %v194, %v179
      %v196 = vmax.f32 %v195, 1e-08
      %v197 = vrcp.pop %v196
      %v198 = vmul.f32 %v179, %v197
      %199 = vst [vmem:[%s155] sm:$0xff] %v198
      %p200 = scmp.lt.s32.totalorder %s13, 1
      %s201 = scalar_select %p200, %s13, 1
      %s202 = smul.addr %s201, 8
      %s203 = scalar_lea.vmem %s2, %s202
      // Predicated region
      $region29: #{_ap_pipeline.1} parent=27 // pred_check
        %p204 = pneg %p83
      $region30: #{_ap_pipeline.1} parent=27 // pred_check_branch
        %206 = sbr.rel (%p204) target = $region32
      $region31: #{_ap_pipeline.1} parent=27 // pred_region
        _
      $region32: #{_ap_pipeline.1} parent=27 // pred_fallthru
        _
    $region28: #{_ap_pipeline.1} parent=5 // pred_fallthru
      _
    %p207 = scmp.le.s32.totalorder 2, %s8
    // Predicated region
    $region33: #{_ap_pipeline.1} parent=5 // pred_check
      %p208 = pneg %p207
    $region34: #{_ap_pipeline.1} parent=5 // pred_check_branch
      %210 = sbr.rel (%p208) target = $region36
    $region35: #{_ap_pipeline.1} parent=5 // pred_region
      %s211 = ssub.s32 %s8, 2
      // Predicated region
      $region37: #{_ap_pipeline.1} parent=35 // pred_check
        %p212 = pneg %p89
      $region38: #{_ap_pipeline.1} parent=35 // pred_check_branch
        %214 = sbr.rel (%p212) target = $region40
      $region39: #{_ap_pipeline.1} parent=35 // pred_region
        %p215 = scmp.lt.s32.totalorder %s14, 1
        %s216 = scalar_select %p215, %s14, 1
        %s217 = smul.addr %s216, 8
        %s218 = scalar_lea.vmem %s2, %s217
      $region40: #{_ap_pipeline.1} parent=35 // pred_fallthru
        _
    $region36: #{_ap_pipeline.1} parent=5 // pred_fallthru
      _
  $region6: #{_ap_pipeline.1} parent=0 // loop_footer
    %s12 = sadd.s32 1, %s8
  $region7: #{_ap_pipeline.1} parent=0 // loop_footer_branch
    %7 = sbr.rel target = $region3
  $region8: #{_ap_pipeline.1} parent=0 // loop_exit
    _

// kernel: reverse.1
$region0: #{reverse.1}
  %s0 = inlined_call_operand.vmem [shape: f32[3,128], index: 0, kind: input, shape index: {}]
  %s1 = inlined_call_operand.vmem [shape: f32[3,128], index: 1, kind: output, shape index: {}]
  %v2 = vlaneseq
  %v3 = vsub.s32 127, %v2
  %4 = vset.pattern.permute.xlu0 %v3
  $region1: #{reverse.1} parent=0
    #allocation0 [shape = 'u8[4096]{0}', space=vmem, size = 0x1000, scoped, tag = 'operand span for operand 0']
    #allocation1 [shape = 'u8[2048]{0}', space=vmem, size = 0x800, scoped, tag = 'packed  for operand 0']
    #allocation2 [shape = 'u8[4096]{0}', space=vmem, size = 0x1000, scoped, tag = 'operand span for operand 1']
    #allocation3 [shape = 'u8[2048]{0}', space=vmem, size = 0x800, scoped, tag = 'packed  for operand 1']
    // Predicated region
    $region2: #{reverse.1} parent=1 // pred_check
      _
    $region3: #{reverse.1} parent=1 // pred_check_branch
      %6 = sbr.rel (0) target = $region5
    $region4: #{reverse.1} parent=1 // pred_region
      // Predicated region
      $region6: #{reverse.1} parent=4 // pred_check
        _
      $region7: #{reverse.1} parent=4 // pred_check_branch
        %8 = sbr.rel target = $region9
      $region8: #{reverse.1} parent=4 // pred_region
        // Predicated region
        $region21: #{reverse.1} parent=8 // pred_check
          _
        $region22: #{reverse.1} parent=8 // pred_check_branch
          %23 = sbr.rel (0) target = $region24
        $region23: #{reverse.1} parent=8 // pred_region
          loop: start=0, step=1, limit=1
          $region25: #{reverse.1} parent=23 // loop_pre_header
            _
          $region26: #{reverse.1} parent=23 // loop_header
            %s26 = sphi 0, %s30
            %p27 = scmp.ge.s32.totalorder %s26, 1
            %s31 = sphi %s0, %s0
            %s32 = sphi [#allocation1], [#allocation1]
          $region27: #{reverse.1} parent=23 // loop_header_branch
            %29 = sbr.rel (%p27) target = $region31
          $region28: #{reverse.1} parent=23 // loop_body
            %v33 = vld [vmem:[%s31] sm:$0xf]
            %34 = vst [vmem:[%s32] sm:$0xf] %v33
          $region29: #{reverse.1} parent=23 // loop_footer
            %s30 = sadd.s32 1, %s26
          $region30: #{reverse.1} parent=23 // loop_footer_branch
            %25 = sbr.rel target = $region26
          $region31: #{reverse.1} parent=23 // loop_exit
            _
        $region24: #{reverse.1} parent=8 // pred_fallthru
          _
      $region9: #{reverse.1} parent=4 // pred_fallthru
        _
      // Predicated region
      $region10: #{reverse.1} parent=4 // pred_check
        _
      $region11: #{reverse.1} parent=4 // pred_check_branch
        %10 = sbr.rel (0) target = $region13
      $region12: #{reverse.1} parent=4 // pred_region
        loop: start=0, step=1, limit=1
        $region14: #{reverse.1} parent=12 // loop_pre_header
          _
        $region15: #{reverse.1} parent=12 // loop_header
          %s13 = sphi 0, %s17
          %p14 = scmp.ge.s32.totalorder %s13, 1
          %s18 = sphi %s0, %s0
          %s19 = sphi [#allocation1], [#allocation1]
        $region16: #{reverse.1} parent=12 // loop_header_branch
          %16 = sbr.rel (%p14) target = $region20
        $region17: #{reverse.1} parent=12 // loop_body
          %v20 = vld [vmem:[%s18] sm:$0xf]
          %21 = vst [vmem:[%s19] sm:$0xf] %v20
        $region18: #{reverse.1} parent=12 // loop_footer
          %s17 = sadd.s32 1, %s13
        $region19: #{reverse.1} parent=12 // loop_footer_branch
          %12 = sbr.rel target = $region15
        $region20: #{reverse.1} parent=12 // loop_exit
          _
      $region13: #{reverse.1} parent=4 // pred_fallthru
        _
    $region5: #{reverse.1} parent=1 // pred_fallthru
      _
    %35 = vnop
    %s37 = sshllo.u32 0, 4
    %v38 = vld [vmem:[#allocation1] sm:%s37]
    %39 = vst [vmem:[#allocation0] sm:%s37] %v38
    %v40 = vld [vmem:[#allocation0] sm:$0xff]
    %41 = vperm.xlu0 %4, %v40
    %v42 = vpop.permute.xlu0 %41
    %43 = vst [vmem:[#allocation2] sm:$0xff] %v42
    %s45 = sshllo.u32 0, 4
    %v47 = vld [vmem:[#allocation2] sm:%s45]
    %s48 = sshllo.u32 0, 4
    %49 = vst [vmem:[#allocation3] sm:%s48] %v47
    // Predicated region
    $region32: #{reverse.1} parent=1 // pred_check
      _
    $region33: #{reverse.1} parent=1 // pred_check_branch
      %51 = sbr.rel (0) target = $region35
    $region34: #{reverse.1} parent=1 // pred_region
      // Predicated region
      $region36: #{reverse.1} parent=34 // pred_check
        _
      $region37: #{reverse.1} parent=34 // pred_check_branch
        %53 = sbr.rel target = $region39
      $region38: #{reverse.1} parent=34 // pred_region
        // Predicated region
        $region51: #{reverse.1} parent=38 // pred_check
          _
        $region52: #{reverse.1} parent=38 // pred_check_branch
          %68 = sbr.rel (0) target = $region54
        $region53: #{reverse.1} parent=38 // pred_region
          loop: start=0, step=1, limit=1
          $region55: #{reverse.1} parent=53 // loop_pre_header
            _
          $region56: #{reverse.1} parent=53 // loop_header
            %s71 = sphi 0, %s75
            %p72 = scmp.ge.s32.totalorder %s71, 1
            %s76 = sphi [#allocation3], [#allocation3]
            %s77 = sphi %s1, %s1
          $region57: #{reverse.1} parent=53 // loop_header_branch
            %74 = sbr.rel (%p72) target = $region61
          $region58: #{reverse.1} parent=53 // loop_body
            %v78 = vld [vmem:[%s76] sm:$0xf]
            %79 = vst [vmem:[%s77] sm:$0xf] %v78
          $region59: #{reverse.1} parent=53 // loop_footer
            %s75 = sadd.s32 1, %s71
          $region60: #{reverse.1} parent=53 // loop_footer_branch
            %70 = sbr.rel target = $region56
          $region61: #{reverse.1} parent=53 // loop_exit
            _
        $region54: #{reverse.1} parent=38 // pred_fallthru
          _
      $region39: #{reverse.1} parent=34 // pred_fallthru
        _
      // Predicated region
      $region40: #{reverse.1} parent=34 // pred_check
        _
      $region41: #{reverse.1} parent=34 // pred_check_branch
        %55 = sbr.rel (0) target = $region43
      $region42: #{reverse.1} parent=34 // pred_region
        loop: start=0, step=1, limit=1
        $region44: #{reverse.1} parent=42 // loop_pre_header
          _
        $region45: #{reverse.1} parent=42 // loop_header
          %s58 = sphi 0, %s62
          %p59 = scmp.ge.s32.totalorder %s58, 1
          %s63 = sphi [#allocation3], [#allocation3]
          %s64 = sphi %s1, %s1
        $region46: #{reverse.1} parent=42 // loop_header_branch
          %61 = sbr.rel (%p59) target = $region50
        $region47: #{reverse.1} parent=42 // loop_body
          %v65 = vld [vmem:[%s63] sm:$0xf]
          %66 = vst [vmem:[%s64] sm:$0xf] %v65
        $region48: #{reverse.1} parent=42 // loop_footer
          %s62 = sadd.s32 1, %s58
        $region49: #{reverse.1} parent=42 // loop_footer_branch
          %57 = sbr.rel target = $region45
        $region50: #{reverse.1} parent=42 // loop_exit
          _
      $region43: #{reverse.1} parent=34 // pred_fallthru
        _
    $region35: #{reverse.1} parent=1 // pred_fallthru
      _
    %80 = vnop

// kernel: reverse.3
$region0: #{reverse.3}
  %s0 = inlined_call_operand.vmem [shape: f32[3,127], index: 0, kind: input, shape index: {}]
  %s1 = inlined_call_operand.vmem [shape: f32[3,127], index: 1, kind: output, shape index: {}]
  %v2 = vlaneseq
  %v3 = vsub.s32 126, %v2
  %4 = vset.pattern.permute.xlu0 %v3
  $region1: #{reverse.3} parent=0
    #allocation0 [shape = 'u8[4096]{0}', space=vmem, size = 0x1000, scoped, tag = 'operand span for operand 0']
    #allocation1 [shape = 'u8[2048]{0}', space=vmem, size = 0x800, scoped, tag = 'packed  for operand 0']
    #allocation2 [shape = 'u8[4096]{0}', space=vmem, size = 0x1000, scoped, tag = 'operand span for operand 1']
    #allocation3 [shape = 'u8[2048]{0}', space=vmem, size = 0x800, scoped, tag = 'packed  for operand 1']
    // Predicated region
    $region2: #{reverse.3} parent=1 // pred_check
      _
    $region3: #{reverse.3} parent=1 // pred_check_branch
      %6 = sbr.rel (0) target = $region5
    $region4: #{reverse.3} parent=1 // pred_region
      // Predicated region
      $region6: #{reverse.3} parent=4 // pred_check
        _
      $region7: #{reverse.3} parent=4 // pred_check_branch
        %8 = sbr.rel target = $region9
      $region8: #{reverse.3} parent=4 // pred_region
        // Predicated region
        $region21: #{reverse.3} parent=8 // pred_check
          _
        $region22: #{reverse.3} parent=8 // pred_check_branch
          %23 = sbr.rel (0) target = $region24
        $region23: #{reverse.3} parent=8 // pred_region
          loop: start=0, step=1, limit=1
          $region25: #{reverse.3} parent=23 // loop_pre_header
            _
          $region26: #{reverse.3} parent=23 // loop_header
            %s26 = sphi 0, %s30
            %p27 = scmp.ge.s32.totalorder %s26, 1
            %s31 = sphi %s0, %s0
            %s32 = sphi [#allocation1], [#allocation1]
          $region27: #{reverse.3} parent=23 // loop_header_branch
            %29 = sbr.rel (%p27) target = $region31
          $region28: #{reverse.3} parent=23 // loop_body
            %v33 = vld [vmem:[%s31] sm:$0xf]
            %34 = vst [vmem:[%s32] sm:$0xf] %v33
          $region29: #{reverse.3} parent=23 // loop_footer
            %s30 = sadd.s32 1, %s26
          $region30: #{reverse.3} parent=23 // loop_footer_branch
            %25 = sbr.rel target = $region26
          $region31: #{reverse.3} parent=23 // loop_exit
            _
        $region24: #{reverse.3} parent=8 // pred_fallthru
          _
      $region9: #{reverse.3} parent=4 // pred_fallthru
        _
      // Predicated region
      $region10: #{reverse.3} parent=4 // pred_check
        _
      $region11: #{reverse.3} parent=4 // pred_check_branch
        %10 = sbr.rel (0) target = $region13
      $region12: #{reverse.3} parent=4 // pred_region
        loop: start=0, step=1, limit=1
        $region14: #{reverse.3} parent=12 // loop_pre_header
          _
        $region15: #{reverse.3} parent=12 // loop_header
          %s13 = sphi 0, %s17
          %p14 = scmp.ge.s32.totalorder %s13, 1
          %s18 = sphi %s0, %s0
          %s19 = sphi [#allocation1], [#allocation1]
        $region16: #{reverse.3} parent=12 // loop_header_branch
          %16 = sbr.rel (%p14) target = $region20
        $region17: #{reverse.3} parent=12 // loop_body
          %v20 = vld [vmem:[%s18] sm:$0xf]
          %21 = vst [vmem:[%s19] sm:$0xf] %v20
        $region18: #{reverse.3} parent=12 // loop_footer
          %s17 = sadd.s32 1, %s13
        $region19: #{reverse.3} parent=12 // loop_footer_branch
          %12 = sbr.rel target = $region15
        $region20: #{reverse.3} parent=12 // loop_exit
          _
      $region13: #{reverse.3} parent=4 // pred_fallthru
        _
    $region5: #{reverse.3} parent=1 // pred_fallthru
      _
    %35 = vnop
    %s37 = sshllo.u32 0, 4
    %v38 = vld [vmem:[#allocation1] sm:%s37]
    %39 = vst [vmem:[#allocation0] sm:%s37] %v38
    %v40 = vld [vmem:[#allocation0] sm:$0xff]
    %41 = vperm.xlu0 %4, %v40
    %v42 = vpop.permute.xlu0 %41
    %43 = vst [vmem:[#allocation2] sm:$0xff] %v42
    %s45 = sshllo.u32 0, 4
    %v47 = vld [vmem:[#allocation2] sm:%s45]
    %s48 = sshllo.u32 0, 4
    %49 = vst [vmem:[#allocation3] sm:%s48] %v47
    // Predicated region
    $region32: #{reverse.3} parent=1 // pred_check
      _
    $region33: #{reverse.3} parent=1 // pred_check_branch
      %51 = sbr.rel (0) target = $region35
    $region34: #{reverse.3} parent=1 // pred_region
      // Predicated region
      $region36: #{reverse.3} parent=34 // pred_check
        _
      $region37: #{reverse.3} parent=34 // pred_check_branch
        %53 = sbr.rel target = $region39
      $region38: #{reverse.3} parent=34 // pred_region
        // Predicated region
        $region51: #{reverse.3} parent=38 // pred_check
          _
        $region52: #{reverse.3} parent=38 // pred_check_branch
          %68 = sbr.rel (0) target = $region54
        $region53: #{reverse.3} parent=38 // pred_region
          loop: start=0, step=1, limit=1
          $region55: #{reverse.3} parent=53 // loop_pre_header
            _
          $region56: #{reverse.3} parent=53 // loop_header
            %s71 = sphi 0, %s75
            %p72 = scmp.ge.s32.totalorder %s71, 1
            %s76 = sphi [#allocation3], [#allocation3]
            %s77 = sphi %s1, %s1
          $region57: #{reverse.3} parent=53 // loop_header_branch
            %74 = sbr.rel (%p72) target = $region61
          $region58: #{reverse.3} parent=53 // loop_body
            %v78 = vld [vmem:[%s76] sm:$0xf]
            %79 = vst [vmem:[%s77] sm:$0xf] %v78
          $region59: #{reverse.3} parent=53 // loop_footer
            %s75 = sadd.s32 1, %s71
          $region60: #{reverse.3} parent=53 // loop_footer_branch
            %70 = sbr.rel target = $region56
          $region61: #{reverse.3} parent=53 // loop_exit
            _
        $region54: #{reverse.3} parent=38 // pred_fallthru
          _
      $region39: #{reverse.3} parent=34 // pred_fallthru
        _
      // Predicated region
      $region40: #{reverse.3} parent=34 // pred_check
        _
      $region41: #{reverse.3} parent=34 // pred_check_branch
        %55 = sbr.rel (0) target = $region43
      $region42: #{reverse.3} parent=34 // pred_region
        loop: start=0, step=1, limit=1
        $region44: #{reverse.3} parent=42 // loop_pre_header
          _
        $region45: #{reverse.3} parent=42 // loop_header
          %s58 = sphi 0, %s62
          %p59 = scmp.ge.s32.totalorder %s58, 1
          %s63 = sphi [#allocation3], [#allocation3]
          %s64 = sphi %s1, %s1
        $region46: #{reverse.3} parent=42 // loop_header_branch
          %61 = sbr.rel (%p59) target = $region50
        $region47: #{reverse.3} parent=42 // loop_body
          %v65 = vld [vmem:[%s63] sm:$0xf]
          %66 = vst [vmem:[%s64] sm:$0xf] %v65
        $region48: #{reverse.3} parent=42 // loop_footer
          %s62 = sadd.s32 1, %s58
        $region49: #{reverse.3} parent=42 // loop_footer_branch
          %57 = sbr.rel target = $region45
        $region50: #{reverse.3} parent=42 // loop_exit
          _
      $region43: #{reverse.3} parent=34 // pred_fallthru
        _
    $region35: #{reverse.3} parent=1 // pred_fallthru
      _
    %80 = vnop

</llo_original>
